<compile_context>
chip_gen: v7x
topology: tpu7x:2x2x1
jax: 0.10.0
libtpu: 0.0.40
codegen_flags: <defaults>
</compile_context>

<pallas_src>
import functools

import jax
import jax.numpy as jnp
from jax.experimental import pallas as pl
from jax.experimental.pallas import tpu as pltpu


# ---------------------------------------------------------------------------
# Kernels
# ---------------------------------------------------------------------------

def _sae_kernel_resident(x_ref, we_ref, be_ref, wd_ref, bd_ref, o_ref):
    """grid_h == 1 path: full W_enc / W_dec stay VMEM-resident (DMA'd once)."""
    # Encoder: MXU matmul in caller dtype (bf16 ok), f32 accumulation,
    # bias-add + tanh in f32.
    h = jnp.tanh(
        jnp.dot(x_ref[...], we_ref[...], preferred_element_type=jnp.float32)
        + be_ref[...].astype(jnp.float32)
    )
    # L1Penalty.forward is the identity (it only shapes the backward pass).
    o_ref[...] = jnp.tanh(
        jnp.dot(h.astype(wd_ref.dtype), wd_ref[...],
                preferred_element_type=jnp.float32)
        + bd_ref[...].astype(jnp.float32)
    ).astype(o_ref.dtype)


def _sae_kernel_streamed(x_ref, we_ref, be_ref, wd_ref, bd_ref, o_ref, acc_ref):
    """grid_h > 1 path: hidden dim tiled, decoder accumulated in f32 scratch."""
    k = pl.program_id(1)

    @pl.when(k == 0)
    def _():
        acc_ref[...] = jnp.zeros_like(acc_ref)

    h = jnp.tanh(
        jnp.dot(x_ref[...], we_ref[...], preferred_element_type=jnp.float32)
        + be_ref[...].astype(jnp.float32)
    )
    # Partial decoder contraction over this hidden tile, accumulated in f32.
    acc_ref[...] += jnp.dot(
        h.astype(wd_ref.dtype), wd_ref[...], preferred_element_type=jnp.float32
    )

    @pl.when(k == pl.num_programs(1) - 1)
    def _():
        o_ref[...] = jnp.tanh(
            acc_ref[...] + bd_ref[...].astype(jnp.float32)
        ).astype(o_ref.dtype)


# ---------------------------------------------------------------------------
# Tiling / budgeting helpers
# ---------------------------------------------------------------------------

def _round_up(x, m):
    return (x + m - 1) // m * m


def _tpu_vmem_and_is_v7():
    """Best-effort trace-time query of VMEM capacity and TC count class."""
    cap = None
    try:
        info = pltpu.get_tpu_info()
        for attr in ("vmem_capacity_bytes", "vmem_size_bytes", "vmem_bytes"):
            v = getattr(info, attr, None)
            if v:
                cap = int(v)
                break
    except Exception:
        cap = None
    kind = ""
    try:
        kind = jax.devices()[0].device_kind.lower()
    except Exception:
        kind = ""
    is_v7 = "v7" in kind
    if cap is None:
        if any(g in kind for g in ("v3", "v4", "v5", "v6")):
            cap = 128 << 20
        else:
            cap = 64 << 20   # conservative default (covers v7x's 64 MiB per TC)
    return cap, is_v7


def _vmem_need(tile_r, tile_h, f_pad, grid_h, bx, bw):
    """Estimated VMEM footprint of one pipelined grid step (bytes)."""
    need = 2 * tile_r * f_pad * bx            # x tile (double-buffered)
    need += 2 * tile_r * f_pad * bx           # out tile (double-buffered)
    need += 2 * f_pad * tile_h * bw           # W_enc tile(s)
    need += 2 * tile_h * f_pad * bw           # W_dec tile(s)
    need += 4 * (tile_h + f_pad) * bw         # biases (tiny)
    need += tile_r * tile_h * (4 + bw)        # encoder h (f32) + cast copy
    if grid_h > 1:
        need += tile_r * f_pad * 4            # f32 decoder accumulator scratch
    return need


def _select_tiles(rows, f_pad, h_pad, bx, bw, budget, sub, prefer_split_rows,
                  tile_rows, tile_hidden):
    rows_r = _round_up(max(rows, 1), sub)

    # Row-tile candidates, largest first.  When weights are streamed they are
    # re-read from HBM once per row tile, so FLOPs/byte ~ tile_r; 1024+ keeps
    # v6e/v7x compute-bound.
    if tile_rows is not None:
        r_cands = [_round_up(min(tile_rows, rows_r), sub)]
    else:
        r_cands = []
        for t in (2048, 1024, 512, 256, 128, 64, 32, 16, 8):
            r = _round_up(min(t, rows_r), sub)
            if r not in r_cands:
                r_cands.append(r)
    if prefer_split_rows and rows_r > sub:
        # v7x: keep >= 2 steps on the "parallel" row axis so both TensorCores
        # get work (grid of 1 along it leaves ~50% of chip FLOPs idle).
        half = _round_up(-(-rows_r // 2), sub)
        r_cands = list(dict.fromkeys(min(r, half) for r in r_cands))

    # Hidden-tile candidates: whole hidden dim first (weights fetched once, no
    # accumulator RMW), then 256-aligned splits (v6e/v7x MXU), 128 fallback.
    if tile_hidden is not None:
        h_cands = [tile_hidden]
    else:
        h_cands = [h_pad]
        for c in (4096, 2048, 1024, 512, 256, 128):
            if c < h_pad and h_pad % c == 0 and c not in h_cands:
                h_cands.append(c)

    # Priority 1: full hidden-dim residency with a reasonably large row tile.
    h0 = h_cands[0]
    g0 = h_pad // h0
    min_r1 = min(rows_r, 128)
    for r in r_cands:
        if r < min_r1:
            continue
        if _vmem_need(r, h0, f_pad, g0, bx, bw) <= budget:
            return r, h0
    # Priority 2: stream hidden tiles; keep the row tile as large as possible
    # (arithmetic intensity), then shrink the hidden tile.
    for r in r_cands:
        for h in h_cands:
            if _vmem_need(r, h, f_pad, h_pad // h, bx, bw) <= budget:
                return r, h
    # Last resort: smallest tiles (only hit for absurd shapes).
    return r_cands[-1], h_cands[-1]


# ---------------------------------------------------------------------------
# Wrapper
# ---------------------------------------------------------------------------

@functools.partial(jax.jit, static_argnames=("tile_rows", "tile_hidden"))
def sparse_autoencoder_forward(x, w_enc, b_enc, w_dec, b_dec, *,
                               tile_rows=None, tile_hidden=None):
    """Fused SAE forward.  x: any shape whose flattening gives rows of size F.

    Weights are stored transposed relative to torch.nn.Linear so the kernel
    computes plain `x @ W (+ b)`:
      w_enc: (F, H)   b_enc: (1, H)   w_dec: (H, F)   b_dec: (1, F)
    """
    feature_size, hidden_size = w_enc.shape
    assert w_dec.shape == (hidden_size, feature_size)
    assert b_enc.shape == (1, hidden_size) and b_dec.shape == (1, feature_size)

    x2d = x.reshape(-1, feature_size)              # input.view(-1, n_outer)
    rows = x2d.shape[0]

    # Pad the feature dim to a lane multiple so loads/stores are lane-dense.
    f_pad = _round_up(feature_size, 128)
    # Pad the hidden dim: 256-aligned (full v6e/v7x MXU) when it is split.
    h_align = 256 if hidden_size > 128 else 128
    h_pad = _round_up(hidden_size, h_align)

    if f_pad != feature_size:
        x2d = jnp.pad(x2d, ((0, 0), (0, f_pad - feature_size)))
        w_enc = jnp.pad(w_enc, ((0, f_pad - feature_size), (0, 0)))
        w_dec = jnp.pad(w_dec, ((0, 0), (0, f_pad - feature_size)))
        b_dec = jnp.pad(b_dec, ((0, 0), (0, f_pad - feature_size)))
    if h_pad != hidden_size:
        # Zero-padded hidden units produce tanh(0)=0 and zero decoder rows, so
        # they contribute nothing to the output.
        w_enc = jnp.pad(w_enc, ((0, 0), (0, h_pad - hidden_size)))
        b_enc = jnp.pad(b_enc, ((0, 0), (0, h_pad - hidden_size)))
        w_dec = jnp.pad(w_dec, ((0, h_pad - hidden_size), (0, 0)))

    bx = x2d.dtype.itemsize
    bw = w_enc.dtype.itemsize
    # Sublane packing of the row dim: f32 -> 8, bf16 -> 16, int8/fp8 -> 32.
    sub = {4: 8, 2: 16, 1: 32}.get(bx, 8)

    # Generation-aware VMEM budgeting (do NOT clamp 128 MiB parts to 64 MiB).
    vmem_cap, is_v7 = _tpu_vmem_and_is_v7()
    if vmem_cap <= (64 << 20):               # v7x-class: 64 MiB per TC
        budget, limit_cap = 44 << 20, 56 << 20
    else:                                    # v5e/v6e: 128 MiB physical
        budget, limit_cap = 88 << 20, 100 << 20

    if tile_hidden is not None:
        assert h_pad % tile_hidden == 0 and (
            tile_hidden == h_pad or tile_hidden % 128 == 0), \
            "tile_hidden must divide the padded hidden dim and be 128-aligned"

    tile_r, tile_h = _select_tiles(rows, f_pad, h_pad, bx, bw, budget, sub,
                                   prefer_split_rows=is_v7,
                                   tile_rows=tile_rows, tile_hidden=tile_hidden)

    padded_rows = _round_up(rows, tile_r)
    if padded_rows != rows:
        x2d = jnp.pad(x2d, ((0, padded_rows - rows), (0, 0)))
    grid_r = padded_rows // tile_r
    grid_h = h_pad // tile_h

    need = _vmem_need(tile_r, tile_h, f_pad, grid_h, bx, bw)
    vmem_limit = int(min(max(need + (4 << 20), 32 << 20), limit_cap))

    if grid_h == 1:
        # Weights are DMA'd from HBM exactly once (constant block indices) and
        # stay VMEM-resident for the whole grid; no accumulator round trips.
        out2d = pl.pallas_call(
            _sae_kernel_resident,
            out_shape=jax.ShapeDtypeStruct((padded_rows, f_pad), x.dtype),
            grid_spec=pltpu.PrefetchScalarGridSpec(
                num_scalar_prefetch=0,
                grid=(grid_r,),
                in_specs=[
                    pl.BlockSpec((tile_r, f_pad), lambda i: (i, 0)),    # x
                    pl.BlockSpec((f_pad, h_pad), lambda i: (0, 0)),     # W_enc
                    pl.BlockSpec((1, h_pad), lambda i: (0, 0)),         # b_enc
                    pl.BlockSpec((h_pad, f_pad), lambda i: (0, 0)),     # W_dec
                    pl.BlockSpec((1, f_pad), lambda i: (0, 0)),         # b_dec
                ],
                out_specs=pl.BlockSpec((tile_r, f_pad), lambda i: (i, 0)),
            ),
            compiler_params=pltpu.CompilerParams(
                dimension_semantics=("parallel",),
                vmem_limit_bytes=vmem_limit,
            ),
        )(x2d, w_enc, b_enc, w_dec, b_dec)
    else:
        # Hidden dim streamed; f32 accumulator finalized on the last k step.
        # TODO(synk): if profiling shows exposed weight DMA on 128 MiB parts,
        # add pipeline_mode=pl.Buffered(3) on the two weight BlockSpecs.
        out2d = pl.pallas_call(
            _sae_kernel_streamed,
            out_shape=jax.ShapeDtypeStruct((padded_rows, f_pad), x.dtype),
            grid_spec=pltpu.PrefetchScalarGridSpec(
                num_scalar_prefetch=0,
                grid=(grid_r, grid_h),
                in_specs=[
                    pl.BlockSpec((tile_r, f_pad), lambda i, k: (i, 0)),   # x
                    pl.BlockSpec((f_pad, tile_h), lambda i, k: (0, k)),   # W_enc
                    pl.BlockSpec((1, tile_h), lambda i, k: (0, k)),       # b_enc
                    pl.BlockSpec((tile_h, f_pad), lambda i, k: (k, 0)),   # W_dec
                    pl.BlockSpec((1, f_pad), lambda i, k: (0, 0)),        # b_dec
                ],
                out_specs=pl.BlockSpec((tile_r, f_pad), lambda i, k: (i, 0)),
                scratch_shapes=[pltpu.VMEM((tile_r, f_pad), jnp.float32)],
            ),
            compiler_params=pltpu.CompilerParams(
                dimension_semantics=("parallel", "arbitrary"),
                vmem_limit_bytes=vmem_limit,
            ),
        )(x2d, w_enc, b_enc, w_dec, b_dec)

    return out2d[:rows, :feature_size].reshape(x.shape)   # out.view_as(input)


# ---------------------------------------------------------------------------
# Demo / self-check
# ---------------------------------------------------------------------------

def _init_linear(key, fan_in, fan_out, dtype):
    """Deterministic init mimicking torch.nn.Linear: U(-1/sqrt(fan_in), +)."""
    kw, kb = jax.random.split(key)
    bound = 1.0 / float(fan_in) ** 0.5
    # Stored transposed: (fan_in, fan_out) so the kernel does x @ W.
    w = jax.random.uniform(kw, (fan_in, fan_out), jnp.float32, -bound, bound)
    b = jax.random.uniform(kb, (1, fan_out), jnp.float32, -bound, bound)
    return w.astype(dtype), b.astype(dtype)


def _reference(x, w_enc, b_enc, w_dec, b_dec):
    """Pure-JAX reference mirroring the kernel math (bf16 operands, f32 acc)."""
    feat = w_enc.shape[0]
    x2d = x.reshape(-1, feat)
    h = jnp.tanh(jnp.dot(x2d, w_enc, preferred_element_type=jnp.float32)
                 + b_enc.astype(jnp.float32))
    out = jnp.tanh(jnp.dot(h.astype(w_dec.dtype), w_dec,
                           preferred_element_type=jnp.float32)
                   + b_dec.astype(jnp.float32))
    return out.astype(x.dtype).reshape(x.shape)


if __name__ == "__main__":
    dtype = jnp.bfloat16
    l1weight = 0.1  # irrelevant in forward (L1Penalty.forward is the identity)
    key = jax.random.PRNGKey(0)

    # --- Test 1: default path (full weight residency, grid_h == 1) ----------
    feature_size, hidden_size = 256, 128
    k_in, k_enc, k_dec, key = jax.random.split(key, 4)
    # Extra leading dims + a row count that is not a tile multiple, to exercise
    # view(-1, F) and the row-padding path.
    x = jax.random.normal(k_in, (2, 9, feature_size), jnp.float32).astype(dtype)
    w_enc, b_enc = _init_linear(k_enc, feature_size, hidden_size, dtype)
    w_dec, b_dec = _init_linear(k_dec, hidden_size, feature_size, dtype)

    out = jax.block_until_ready(
        sparse_autoencoder_forward(x, w_enc, b_enc, w_dec, b_dec))
    ref = _reference(x, w_enc, b_enc, w_dec, b_dec)
    assert out.shape == x.shape and out.dtype == x.dtype
    err = float(jnp.max(jnp.abs(out.astype(jnp.float32) - ref.astype(jnp.float32))))
    assert err <= 3e-2, f"resident path mismatch: max abs err = {err}"

    # --- Test 2: force the streamed/accumulator path (grid_h > 1) -----------
    feature_size, hidden_size = 256, 512
    k_in, k_enc, k_dec, key = jax.random.split(key, 4)
    x = jax.random.normal(k_in, (3, 7, feature_size), jnp.float32).astype(dtype)
    w_enc, b_enc = _init_linear(k_enc, feature_size, hidden_size, dtype)
    w_dec, b_dec = _init_linear(k_dec, hidden_size, feature_size, dtype)

    out = jax.block_until_ready(
        sparse_autoencoder_forward(x, w_enc, b_enc, w_dec, b_dec,
                                   tile_rows=16, tile_hidden=256))
    ref = _reference(x, w_enc, b_enc, w_dec, b_dec)
    assert out.shape == x.shape and out.dtype == x.dtype
    err = float(jnp.max(jnp.abs(out.astype(jnp.float32) - ref.astype(jnp.float32))))
    assert err <= 3e-2, f"streamed path mismatch: max abs err = {err}"

    print("KERNEL_OK")
</pallas_src>

<mosaic_0001>
module attributes {stable_mosaic.version = 11 : i64} {
  func.func @_sae_kernel_resident(%arg0: i32, %arg1: memref<32x256xbf16, #tpu.memory_space<vmem>>, %arg2: memref<256x128xbf16, #tpu.memory_space<vmem>>, %arg3: memref<1x128xbf16, #tpu.memory_space<vmem>>, %arg4: memref<128x256xbf16, #tpu.memory_space<vmem>>, %arg5: memref<1x256xbf16, #tpu.memory_space<vmem>>, %arg6: memref<32x256xbf16, #tpu.memory_space<vmem>>) attributes {dimension_semantics = [#tpu.dimension_semantics<parallel>], iteration_bounds = array<i64: 1>, scalar_prefetch = 0 : i64, scratch_operands = 0 : i64, tpu.core_type = #tpu.core_type<tc>, window_params = [{transform_indices = @transform_0, window_bounds = array<i64: 32, 256>}, {pipeline_mode = #tpu.pipeline_mode<synchronous>, transform_indices = @transform_1, window_bounds = array<i64: 256, 128>}, {pipeline_mode = #tpu.pipeline_mode<synchronous>, transform_indices = @transform_2, window_bounds = array<i64: 1, 128>}, {pipeline_mode = #tpu.pipeline_mode<synchronous>, transform_indices = @transform_3, window_bounds = array<i64: 128, 256>}, {pipeline_mode = #tpu.pipeline_mode<synchronous>, transform_indices = @transform_4, window_bounds = array<i64: 1, 256>}, {transform_indices = @transform_5, window_bounds = array<i64: 32, 256>}]} {
    %c0 = arith.constant 0 : index
    %c0_0 = arith.constant 0 : index
    %0 = vector.load %arg1[%c0, %c0_0] : memref<32x256xbf16, #tpu.memory_space<vmem>>, vector<32x256xbf16>
    %c0_1 = arith.constant 0 : index
    %c0_2 = arith.constant 0 : index
    %1 = vector.load %arg2[%c0_1, %c0_2] : memref<256x128xbf16, #tpu.memory_space<vmem>>, vector<256x128xbf16>
    %cst = arith.constant dense<0.000000e+00> : vector<32x128xf32>
    %2 = tpu.matmul %0, %1, %cst {dimension_numbers = #tpu.dot_dimension_numbers<[1], [0], [0], [1], [0, 0, 1, 1], [], []>} : vector<32x256xbf16>, vector<256x128xbf16>, vector<32x128xf32> -> vector<32x128xf32>
    %c0_3 = arith.constant 0 : index
    %c0_4 = arith.constant 0 : index
    %3 = vector.load %arg3[%c0_3, %c0_4] : memref<1x128xbf16, #tpu.memory_space<vmem>>, vector<1x128xbf16>
    %4 = arith.extf %3 : vector<1x128xbf16> to vector<1x128xf32>
    %5 = vector.broadcast %4 : vector<1x128xf32> to vector<32x128xf32>
    %6 = arith.addf %2, %5 : vector<32x128xf32>
    %7 = math.tanh %6 : vector<32x128xf32>
    %8 = arith.truncf %7 : vector<32x128xf32> to vector<32x128xbf16>
    %c0_5 = arith.constant 0 : index
    %c0_6 = arith.constant 0 : index
    %9 = vector.load %arg4[%c0_5, %c0_6] : memref<128x256xbf16, #tpu.memory_space<vmem>>, vector<128x256xbf16>
    %cst_7 = arith.constant dense<0.000000e+00> : vector<32x256xf32>
    %10 = tpu.matmul %8, %9, %cst_7 {dimension_numbers = #tpu.dot_dimension_numbers<[1], [0], [0], [1], [0, 0, 1, 1], [], []>} : vector<32x128xbf16>, vector<128x256xbf16>, vector<32x256xf32> -> vector<32x256xf32>
    %c0_8 = arith.constant 0 : index
    %c0_9 = arith.constant 0 : index
    %11 = vector.load %arg5[%c0_8, %c0_9] : memref<1x256xbf16, #tpu.memory_space<vmem>>, vector<1x256xbf16>
    %12 = arith.extf %11 : vector<1x256xbf16> to vector<1x256xf32>
    %13 = vector.broadcast %12 : vector<1x256xf32> to vector<32x256xf32>
    %14 = arith.addf %10, %13 : vector<32x256xf32>
    %15 = math.tanh %14 : vector<32x256xf32>
    %16 = arith.truncf %15 : vector<32x256xf32> to vector<32x256xbf16>
    %c0_10 = arith.constant 0 : index
    %c0_11 = arith.constant 0 : index
    %17 = vector.load %arg6[%c0_10, %c0_11] : memref<32x256xbf16, #tpu.memory_space<vmem>>, vector<32x256xbf16>
    tpu.vector_store %arg6[%c0_10, %c0_11], %16 {strides = array<i32>} : memref<32x256xbf16, #tpu.memory_space<vmem>>, vector<32x256xbf16>,
    return
  }
  func.func @transform_0(%arg0: i32) -> (i32, i32) {
    %c0_i32 = arith.constant 0 : i32
    %c0_i32_0 = arith.constant 0 : i32
    return %arg0, %c0_i32 : i32, i32
  }
  func.func @transform_1(%arg0: i32) -> (i32, i32) {
    %c0_i32 = arith.constant 0 : i32
    %c0_i32_0 = arith.constant 0 : i32
    %c0_i32_1 = arith.constant 0 : i32
    return %c0_i32, %c0_i32_0 : i32, i32
  }
  func.func @transform_2(%arg0: i32) -> (i32, i32) {
    %c0_i32 = arith.constant 0 : i32
    %c0_i32_0 = arith.constant 0 : i32
    %c0_i32_1 = arith.constant 0 : i32
    return %c0_i32, %c0_i32_0 : i32, i32
  }
  func.func @transform_3(%arg0: i32) -> (i32, i32) {
    %c0_i32 = arith.constant 0 : i32
    %c0_i32_0 = arith.constant 0 : i32
    %c0_i32_1 = arith.constant 0 : i32
    return %c0_i32, %c0_i32_0 : i32, i32
  }
  func.func @transform_4(%arg0: i32) -> (i32, i32) {
    %c0_i32 = arith.constant 0 : i32
    %c0_i32_0 = arith.constant 0 : i32
    %c0_i32_1 = arith.constant 0 : i32
    return %c0_i32, %c0_i32_0 : i32, i32
  }
  func.func @transform_5(%arg0: i32) -> (i32, i32) {
    %c0_i32 = arith.constant 0 : i32
    %c0_i32_0 = arith.constant 0 : i32
    return %arg0, %c0_i32 : i32, i32
  }
}

</mosaic_0001>

<llo_original>
// kernel: sparse_autoencoder_forward.1
$region0: #{sparse_autoencoder_forward.1}
  #allocation0 [shape = 'u32[]', space=smem, size = 0x4, offset = 0x4, fixed_abs, tag = 'smem constant byte address 0x4 - core index']
  #allocation1 [shape = 'u32[144,128]{1,0:T(1,128)}', space=vmem, size = 0x12000, scoped, tag = 'internal scratch']
  %s0 = inlined_call_operand.vmem [shape: bf16[32,256], index: 0, kind: input, shape index: {}]
  %s1 = inlined_call_operand.vmem [shape: bf16[256,128], index: 1, kind: input, shape index: {}]
  %s2 = inlined_call_operand.vmem [shape: bf16[1,128], index: 2, kind: input, shape index: {}]
  %s3 = inlined_call_operand.hbm [shape: bf16[128,256], index: 3, kind: input, shape index: {}]
  %s4 = inlined_call_operand.vmem [shape: bf16[1,256], index: 4, kind: input, shape index: {}]
  %s5 = inlined_call_operand.vmem [shape: bf16[32,256], index: 5, kind: output, shape index: {}]
  %s6 = sld [smem:[#allocation0]]
  $region34: #{sparse_autoencoder_forward.1} parent=0
    _
  %s8 = ssub.s32 1, %s6
  %s9 = scalar_select 0, %s8, %s6
  $region1: #{sparse_autoencoder_forward.1} parent=0
    #allocation2 [shape = 'u8[65536]{0}', space=vmem, size = 0x10000, scoped, tag = 'input window, operand 3, single buffered']
    #allocation3 [shape = 's32[1]{0}', space=sflag, size = 0x4, scoped, tag = 'scoped memory for sparse_autoencoder_forward.1']
    %10 = vsyncpa [#allocation3], 0
    // Predicated region
    $region2: #{sparse_autoencoder_forward.1} parent=1 // pred_check
      _
    $region3: #{sparse_autoencoder_forward.1} parent=1 // pred_check_branch
      %12 = sbr.rel (0) target = $region5
    $region4: #{sparse_autoencoder_forward.1} parent=1 // pred_region
      _
    $region5: #{sparse_autoencoder_forward.1} parent=1 // pred_fallthru
      _
    // Predicated region
    $region6: #{sparse_autoencoder_forward.1} parent=1 // pred_check
      _
    $region7: #{sparse_autoencoder_forward.1} parent=1 // pred_check_branch
      %14 = sbr.rel (0) target = $region9
    $region8: #{sparse_autoencoder_forward.1} parent=1 // pred_region
      _
    $region9: #{sparse_autoencoder_forward.1} parent=1 // pred_fallthru
      _
    // Predicated region
    $region10: #{sparse_autoencoder_forward.1} parent=1 // pred_check
      _
    $region11: #{sparse_autoencoder_forward.1} parent=1 // pred_check_branch
      %16 = sbr.rel (0) target = $region13
    $region12: #{sparse_autoencoder_forward.1} parent=1 // pred_region
      _
    $region13: #{sparse_autoencoder_forward.1} parent=1 // pred_fallthru
      _
    // Predicated region
    $region14: #{sparse_autoencoder_forward.1} parent=1 // pred_check
      _
    $region15: #{sparse_autoencoder_forward.1} parent=1 // pred_check_branch
      %18 = sbr.rel (0) target = $region17
    $region16: #{sparse_autoencoder_forward.1} parent=1 // pred_region
      %s20 = ssub.s32 2048, 2048
      %21 = vsyncadd [#allocation3], %s20
      %s22 = sshll.u32 [#allocation2], 4
      %s23 = int_to_ptr.vmem [resolvable:$true] %s22
      %28 = dma.hbm_to_vmem [thread:$0]  %s3, 2048, %s23, [#allocation3], 128, 128, 8
    $region17: #{sparse_autoencoder_forward.1} parent=1 // pred_fallthru
      _
    // Predicated region
    $region18: #{sparse_autoencoder_forward.1} parent=1 // pred_check
      _
    $region19: #{sparse_autoencoder_forward.1} parent=1 // pred_check_branch
      %30 = sbr.rel (0) target = $region21
    $region20: #{sparse_autoencoder_forward.1} parent=1 // pred_region
      _
    $region21: #{sparse_autoencoder_forward.1} parent=1 // pred_fallthru
      _
    // Predicated region
    $region22: #{sparse_autoencoder_forward.1} parent=1 // pred_check
      _
    $region23: #{sparse_autoencoder_forward.1} parent=1 // pred_check_branch
      %32 = sbr.rel (0) target = $region25
    $region24: #{sparse_autoencoder_forward.1} parent=1 // pred_region
      %33 = dma.done [#allocation3], 2048
    $region25: #{sparse_autoencoder_forward.1} parent=1 // pred_fallthru
      _
    %v35 = vld [vmem:[%s0] sm:$0xff]
    %v36 = vld [vmem:[%s0 + $0x8] sm:$0xff]
    %v37 = vld [vmem:[%s0 + $0x10] sm:$0xff]
    %v38 = vld [vmem:[%s0 + $0x18] sm:$0xff]
    %v39 = vld [vmem:[%s1] sm:$0xf]
    %v40 = vld [vmem:[%s1 + $0x4] sm:$0xf]
    %v41 = vld [vmem:[%s1 + $0x8] sm:$0xf]
    %v42 = vld [vmem:[%s1 + $0xc] sm:$0xf]
    %v43 = vld [vmem:[%s1 + $0x10] sm:$0xf]
    %v44 = vld [vmem:[%s1 + $0x14] sm:$0xf]
    %v45 = vld [vmem:[%s1 + $0x18] sm:$0xf]
    %v46 = vld [vmem:[%s1 + $0x1c] sm:$0xf]
    %v47 = vld [vmem:[%s1 + $0x20] sm:$0xf]
    %v48 = vld [vmem:[%s1 + $0x24] sm:$0xf]
    %v49 = vld [vmem:[%s1 + $0x28] sm:$0xf]
    %v50 = vld [vmem:[%s1 + $0x2c] sm:$0xf]
    %v51 = vld [vmem:[%s1 + $0x30] sm:$0xf]
    %v52 = vld [vmem:[%s1 + $0x34] sm:$0xf]
    %v53 = vld [vmem:[%s1 + $0x38] sm:$0xf]
    %v54 = vld [vmem:[%s1 + $0x3c] sm:$0xf]
    %v55 = vld [vmem:[%s1 + $0x40] sm:$0xf]
    %v56 = vld [vmem:[%s1 + $0x44] sm:$0xf]
    %v57 = vld [vmem:[%s1 + $0x48] sm:$0xf]
    %v58 = vld [vmem:[%s1 + $0x4c] sm:$0xf]
    %v59 = vld [vmem:[%s1 + $0x50] sm:$0xf]
    %v60 = vld [vmem:[%s1 + $0x54] sm:$0xf]
    %v61 = vld [vmem:[%s1 + $0x58] sm:$0xf]
    %v62 = vld [vmem:[%s1 + $0x5c] sm:$0xf]
    %v63 = vld [vmem:[%s1 + $0x60] sm:$0xf]
    %v64 = vld [vmem:[%s1 + $0x64] sm:$0xf]
    %v65 = vld [vmem:[%s1 + $0x68] sm:$0xf]
    %v66 = vld [vmem:[%s1 + $0x6c] sm:$0xf]
    %v67 = vld [vmem:[%s1 + $0x70] sm:$0xf]
    %v68 = vld [vmem:[%s1 + $0x74] sm:$0xf]
    %v69 = vld [vmem:[%s1 + $0x78] sm:$0xf]
    %v70 = vld [vmem:[%s1 + $0x7c] sm:$0xf]
    %v71 = vld [vmem:[%s2] sm:$0x1]
    %v72 = vunpack.c.l.bf16 %v71
    %v73 = vlaneseq
    %v74 = vshrl.u32 %v73, 7
    %v75 = vsub.s32 0, %v74
    %v76 = vrot.slane %v72, %v75
    %v81 = vunpack.c.l.b16 %v35
    %v82 = vunpack.c.h.b16 %v35
    %v83 = vunpack.c.l.b16 %v36
    %v84 = vunpack.c.h.b16 %v36
    %v85 = vunpack.c.l.b16 %v37
    %v86 = vunpack.c.h.b16 %v37
    %v87 = vunpack.c.l.b16 %v38
    %v88 = vunpack.c.h.b16 %v38
    %v89 = vpack.c.b16 %v83, %v81
    %v90 = vpack.c.b16 %v84, %v82
    %v91 = vpack.c.b16 %v87, %v85
    %v92 = vpack.c.b16 %v88, %v86
    %v129 = vunpack.c.l.b16 %v39
    %v130 = vunpack.c.l.b16 %v40
    %v131 = vunpack.c.l.b16 %v41
    %v132 = vunpack.c.l.b16 %v42
    %v133 = vunpack.c.l.b16 %v43
    %v134 = vunpack.c.l.b16 %v44
    %v135 = vunpack.c.l.b16 %v45
    %v136 = vunpack.c.l.b16 %v46
    %v137 = vunpack.c.l.b16 %v47
    %v138 = vunpack.c.l.b16 %v48
    %v139 = vunpack.c.l.b16 %v49
    %v140 = vunpack.c.l.b16 %v50
    %v141 = vunpack.c.l.b16 %v51
    %v142 = vunpack.c.l.b16 %v52
    %v143 = vunpack.c.l.b16 %v53
    %v144 = vunpack.c.l.b16 %v54
    %v145 = vunpack.c.l.b16 %v55
    %v146 = vunpack.c.l.b16 %v56
    %v147 = vunpack.c.l.b16 %v57
    %v148 = vunpack.c.l.b16 %v58
    %v149 = vunpack.c.l.b16 %v59
    %v150 = vunpack.c.l.b16 %v60
    %v151 = vunpack.c.l.b16 %v61
    %v152 = vunpack.c.l.b16 %v62
    %v153 = vunpack.c.l.b16 %v63
    %v154 = vunpack.c.l.b16 %v64
    %v155 = vunpack.c.l.b16 %v65
    %v156 = vunpack.c.l.b16 %v66
    %v157 = vunpack.c.l.b16 %v67
    %v158 = vunpack.c.l.b16 %v68
    %v159 = vunpack.c.l.b16 %v69
    %v160 = vunpack.c.l.b16 %v70
    %v161 = vpack.c.b16 %v130, %v129
    %v162 = vpack.c.b16 %v132, %v131
    %v163 = vpack.c.b16 %v134, %v133
    %v164 = vpack.c.b16 %v136, %v135
    %v165 = vpack.c.b16 %v138, %v137
    %v166 = vpack.c.b16 %v140, %v139
    %v167 = vpack.c.b16 %v142, %v141
    %v168 = vpack.c.b16 %v144, %v143
    %v169 = vpack.c.b16 %v146, %v145
    %v170 = vpack.c.b16 %v148, %v147
    %v171 = vpack.c.b16 %v150, %v149
    %v172 = vpack.c.b16 %v152, %v151
    %v173 = vpack.c.b16 %v154, %v153
    %v174 = vpack.c.b16 %v156, %v155
    %v175 = vpack.c.b16 %v158, %v157
    %v176 = vpack.c.b16 %v160, %v159
    %193 = vmatprep.subr.bf16.mxu0 0
    %194 = vmatpush1.bf16.msra.mxu0 %v161
    %195 = vmatprep.subr.bf16.mxu0 0
    %196 = vmatpush1.bf16.msra.mxu0 %v162
    %197 = vmatprep.subr.bf16.mxu0 0
    %198 = vmatpush1.bf16.msra.mxu0 %v163
    %199 = vmatprep.subr.bf16.mxu0 0
    %200 = vmatpush1.bf16.msra.mxu0 %v164
    %201 = vmatprep.subr.bf16.mxu0 0
    %202 = vmatpush1.bf16.msra.mxu0 %v165
    %203 = vmatprep.subr.bf16.mxu0 0
    %204 = vmatpush1.bf16.msra.mxu0 %v166
    %205 = vmatprep.subr.bf16.mxu0 0
    %206 = vmatpush1.bf16.msra.mxu0 %v167
    %207 = vmatprep.subr.bf16.mxu0 0
    %208 = vmatpush1.bf16.msra.mxu0 %v168
    %209 = vmatprep.subr.bf16.mxu0 0
    %210 = vmatpush1.bf16.msra.mxu0 %v169
    %211 = vmatprep.subr.bf16.mxu0 0
    %212 = vmatpush1.bf16.msra.mxu0 %v170
    %213 = vmatprep.subr.bf16.mxu0 0
    %214 = vmatpush1.bf16.msra.mxu0 %v171
    %215 = vmatprep.subr.bf16.mxu0 0
    %216 = vmatpush1.bf16.msra.mxu0 %v172
    %217 = vmatprep.subr.bf16.mxu0 0
    %218 = vmatpush1.bf16.msra.mxu0 %v173
    %219 = vmatprep.subr.bf16.mxu0 0
    %220 = vmatpush1.bf16.msra.mxu0 %v174
    %221 = vmatprep.subr.bf16.mxu0 0
    %222 = vmatpush1.bf16.msra.mxu0 %v175
    %223 = vmatprep.subr.bf16.mxu0 0
    %224 = vmatpush1.bf16.msra.mxu0 %v176
    %225 = vmatprep.mubr.bf16.mxu0 %v90
    %226 = vmatmul.mubr.bf16.gmra.mrb[0].mxu0 %v89
    %v227 = vpop.f32.mrb[0].mxu0
    %v228 = vadd.f32 %v76, %v227
    %v229 = vpop.f32.mrb[0].mxu0
    %v230 = vpop.f32.mrb[0].mxu0
    %v231 = vadd.f32 %v76, %v230
    %v232 = vpop.f32.mrb[0].mxu0
    %233 = vmatprep.mubr.bf16.mxu0 %v92
    %234 = vmatmul.mubr.bf16.gmra.mrb[0].mxu0 %v91
    %v235 = vpop.f32.mrb[0].mxu0
    %v236 = vadd.f32 %v76, %v235
    %v237 = vpop.f32.mrb[0].mxu0
    %v238 = vpop.f32.mrb[0].mxu0
    %v239 = vadd.f32 %v76, %v238
    %v240 = vpop.f32.mrb[0].mxu0
    %241 = vdwg.mxu0
    %v242 = vtanh.pop %v228
    %v243 = vtanh.pop %v231
    %v244 = vtanh.pop %v236
    %v245 = vtanh.pop %v239
    %v246 = vpack.c.bf16 %v243, %v242
    %v247 = vpack.c.bf16 %v245, %v244
    %v248 = vld [vmem:[#allocation2] sm:$0xff]
    %v249 = vld [vmem:[#allocation2 + $0x8] sm:$0xff]
    %v250 = vld [vmem:[#allocation2 + $0x10] sm:$0xff]
    %v251 = vld [vmem:[#allocation2 + $0x18] sm:$0xff]
    %v252 = vld [vmem:[#allocation2 + $0x20] sm:$0xff]
    %v253 = vld [vmem:[#allocation2 + $0x28] sm:$0xff]
    %v254 = vld [vmem:[#allocation2 + $0x30] sm:$0xff]
    %v255 = vld [vmem:[#allocation2 + $0x38] sm:$0xff]
    %v256 = vld [vmem:[#allocation2 + $0x40] sm:$0xff]
    %v257 = vld [vmem:[#allocation2 + $0x48] sm:$0xff]
    %v258 = vld [vmem:[#allocation2 + $0x50] sm:$0xff]
    %v259 = vld [vmem:[#allocation2 + $0x58] sm:$0xff]
    %v260 = vld [vmem:[#allocation2 + $0x60] sm:$0xff]
    %v261 = vld [vmem:[#allocation2 + $0x68] sm:$0xff]
    %v262 = vld [vmem:[#allocation2 + $0x70] sm:$0xff]
    %v263 = vld [vmem:[#allocation2 + $0x78] sm:$0xff]
    %v264 = vld [vmem:[%s4] sm:$0x3]
    %v265 = vunpack.c.l.bf16 %v264
    %v267 = vlaneseq
    %v268 = vshrl.u32 %v267, 7
    %v269 = vsub.s32 0, %v268
    %v270 = vrot.slane %v265, %v269
    %v271 = vlaneseq
    %v272 = vshrl.u32 %v271, 7
    %v273 = vsub.s32 2, %v272
    %v274 = vrot.slane %v265, %v273
    %v277 = vlaneseq
    %v278 = vshrl.u32 %v277, 7
    %v279 = vsub.s32 0, %v278
    %v280 = vrot.slane %v270, %v279
    %v281 = vlaneseq
    %v282 = vshrl.u32 %v281, 7
    %v283 = vsub.s32 0, %v282
    %v284 = vrot.slane %v274, %v283
    %v301 = vunpack.c.l.b16 %v248
    %v302 = vunpack.c.h.b16 %v248
    %v303 = vunpack.c.l.b16 %v249
    %v304 = vunpack.c.h.b16 %v249
    %v305 = vunpack.c.l.b16 %v250
    %v306 = vunpack.c.h.b16 %v250
    %v307 = vunpack.c.l.b16 %v251
    %v308 = vunpack.c.h.b16 %v251
    %v309 = vunpack.c.l.b16 %v252
    %v310 = vunpack.c.h.b16 %v252
    %v311 = vunpack.c.l.b16 %v253
    %v312 = vunpack.c.h.b16 %v253
    %v313 = vunpack.c.l.b16 %v254
    %v314 = vunpack.c.h.b16 %v254
    %v315 = vunpack.c.l.b16 %v255
    %v316 = vunpack.c.h.b16 %v255
    %v317 = vunpack.c.l.b16 %v256
    %v318 = vunpack.c.h.b16 %v256
    %v319 = vunpack.c.l.b16 %v257
    %v320 = vunpack.c.h.b16 %v257
    %v321 = vunpack.c.l.b16 %v258
    %v322 = vunpack.c.h.b16 %v258
    %v323 = vunpack.c.l.b16 %v259
    %v324 = vunpack.c.h.b16 %v259
    %v325 = vunpack.c.l.b16 %v260
    %v326 = vunpack.c.h.b16 %v260
    %v327 = vunpack.c.l.b16 %v261
    %v328 = vunpack.c.h.b16 %v261
    %v329 = vunpack.c.l.b16 %v262
    %v330 = vunpack.c.h.b16 %v262
    %v331 = vunpack.c.l.b16 %v263
    %v332 = vunpack.c.h.b16 %v263
    %v333 = vpack.c.b16 %v303, %v301
    %v334 = vpack.c.b16 %v304, %v302
    %v335 = vpack.c.b16 %v307, %v305
    %v336 = vpack.c.b16 %v308, %v306
    %v337 = vpack.c.b16 %v311, %v309
    %v338 = vpack.c.b16 %v312, %v310
    %v339 = vpack.c.b16 %v315, %v313
    %v340 = vpack.c.b16 %v316, %v314
    %v341 = vpack.c.b16 %v319, %v317
    %v342 = vpack.c.b16 %v320, %v318
    %v343 = vpack.c.b16 %v323, %v321
    %v344 = vpack.c.b16 %v324, %v322
    %v345 = vpack.c.b16 %v327, %v325
    %v346 = vpack.c.b16 %v328, %v326
    %v347 = vpack.c.b16 %v331, %v329
    %v348 = vpack.c.b16 %v332, %v330
    %365 = vmatprep.subr.bf16.mxu0 %v334
    %366 = vmatpush1.bf16.msra.mxu0 %v333
    %367 = vmatprep.subr.bf16.mxu0 %v336
    %368 = vmatpush1.bf16.msra.mxu0 %v335
    %369 = vmatprep.subr.bf16.mxu0 %v338
    %370 = vmatpush1.bf16.msra.mxu0 %v337
    %371 = vmatprep.subr.bf16.mxu0 %v340
    %372 = vmatpush1.bf16.msra.mxu0 %v339
    %373 = vmatprep.subr.bf16.mxu0 %v342
    %374 = vmatpush1.bf16.msra.mxu0 %v341
    %375 = vmatprep.subr.bf16.mxu0 %v344
    %376 = vmatpush1.bf16.msra.mxu0 %v343
    %377 = vmatprep.subr.bf16.mxu0 %v346
    %378 = vmatpush1.bf16.msra.mxu0 %v345
    %379 = vmatprep.subr.bf16.mxu0 %v348
    %380 = vmatpush1.bf16.msra.mxu0 %v347
    %381 = vmatprep.subr.bf16.mxu0 0
    %382 = vmatpush1.bf16.msra.mxu0 0
    %383 = vmatprep.subr.bf16.mxu0 0
    %384 = vmatpush1.bf16.msra.mxu0 0
    %385 = vmatprep.subr.bf16.mxu0 0
    %386 = vmatpush1.bf16.msra.mxu0 0
    %387 = vmatprep.subr.bf16.mxu0 0
    %388 = vmatpush1.bf16.msra.mxu0 0
    %389 = vmatprep.subr.bf16.mxu0 0
    %390 = vmatpush1.bf16.msra.mxu0 0
    %391 = vmatprep.subr.bf16.mxu0 0
    %392 = vmatpush1.bf16.msra.mxu0 0
    %393 = vmatprep.subr.bf16.mxu0 0
    %394 = vmatpush1.bf16.msra.mxu0 0
    %395 = vmatprep.subr.bf16.mxu0 0
    %396 = vmatpush1.bf16.msra.mxu0 0
    %397 = vmatprep.mubr.bf16.mxu0 0
    %398 = vmatmul.mubr.bf16.gmra.mrb[0].mxu0 %v246
    %v399 = vpop.f32.mrb[0].mxu0
    %v400 = vadd.f32 %v280, %v399
    %v401 = vpop.f32.mrb[0].mxu0
    %v402 = vadd.f32 %v284, %v401
    %v403 = vpop.f32.mrb[0].mxu0
    %v404 = vadd.f32 %v280, %v403
    %v405 = vpop.f32.mrb[0].mxu0
    %v406 = vadd.f32 %v284, %v405
    %407 = vmatprep.mubr.bf16.mxu0 0
    %408 = vmatmul.mubr.bf16.gmra.mrb[0].mxu0 %v247
    %v409 = vpop.f32.mrb[0].mxu0
    %v410 = vadd.f32 %v280, %v409
    %v411 = vpop.f32.mrb[0].mxu0
    %v412 = vadd.f32 %v284, %v411
    %v413 = vpop.f32.mrb[0].mxu0
    %v414 = vadd.f32 %v280, %v413
    %v415 = vpop.f32.mrb[0].mxu0
    %v416 = vadd.f32 %v284, %v415
    %417 = vdwg.mxu0
    %v418 = vtanh.pop %v400
    %v419 = vtanh.pop %v402
    %v420 = vtanh.pop %v404
    %v421 = vtanh.pop %v406
    %v422 = vtanh.pop %v410
    %v423 = vtanh.pop %v412
    %v424 = vtanh.pop %v414
    %v425 = vtanh.pop %v416
    %v426 = vpack.c.bf16 %v420, %v418
    %v427 = vpack.c.bf16 %v421, %v419
    %v428 = vpack.c.bf16 %v424, %v422
    %v429 = vpack.c.bf16 %v425, %v423
    %v434 = vunpack.c.l.b16 %v426
    %v435 = vunpack.c.l.b16 %v427
    %v436 = vunpack.c.h.b16 %v426
    %v437 = vunpack.c.h.b16 %v427
    %v438 = vunpack.c.l.b16 %v428
    %v439 = vunpack.c.l.b16 %v429
    %v440 = vunpack.c.h.b16 %v428
    %v441 = vunpack.c.h.b16 %v429
    %v442 = vpack.c.b16 %v435, %v434
    %v443 = vpack.c.b16 %v437, %v436
    %v444 = vpack.c.b16 %v439, %v438
    %v445 = vpack.c.b16 %v441, %v440
    %450 = vst [vmem:[%s5] sm:$0xff] %v442
    %451 = vst [vmem:[%s5 + $0x8] sm:$0xff] %v443
    %452 = vst [vmem:[%s5 + $0x10] sm:$0xff] %v444
    %453 = vst [vmem:[%s5 + $0x18] sm:$0xff] %v445
    // Predicated region
    $region26: #{sparse_autoencoder_forward.1} parent=1 // pred_check
      _
    $region27: #{sparse_autoencoder_forward.1} parent=1 // pred_check_branch
      %455 = sbr.rel (0) target = $region29
    $region28: #{sparse_autoencoder_forward.1} parent=1 // pred_region
      _
    $region29: #{sparse_autoencoder_forward.1} parent=1 // pred_fallthru
      _
    // Predicated region
    $region30: #{sparse_autoencoder_forward.1} parent=1 // pred_check
      _
    $region31: #{sparse_autoencoder_forward.1} parent=1 // pred_check_branch
      %457 = sbr.rel (0) target = $region33
    $region32: #{sparse_autoencoder_forward.1} parent=1 // pred_region
      _
    $region33: #{sparse_autoencoder_forward.1} parent=1 // pred_fallthru
      _
    %458 = vsyncpa [#allocation3], 1

</llo_original>
